<compile_context>
chip_gen: v5e
topology: v5e:2x2
jax: 0.10.0
libtpu: 0.0.40
codegen_flags: <defaults>
</compile_context>

<pallas_src>
import functools

import jax
import jax.numpy as jnp
import numpy as np
from jax.experimental import pallas as pl
from jax.experimental.pallas import tpu as pltpu


def _round_up(x, m):
  return ((x + m - 1) // m) * m


def _attention_cell_kernel(
    h_ref, c_ref, bH_ref, ohg_b_ref,
    i2h_wT_ref, h2h_wT_ref, h2h_b_ref, score_w_ref, w_catT_ref,
    h_out_ref, c_out_ref, alpha_ref,
    *, hidden_size, t_valid, time_chunk, bf16_activations, exact_div):
  Hs = hidden_size
  BB, Tp, D = bH_ref.shape
  cdt = i2h_wT_ref.dtype                    # MXU operand dtype (bf16 or f32)

  H = bH_ref[...]                           # (BB, Tp, D)  cdt
  h = h_ref[...]                            # (BB, Hs)     f32 state
  c = c_ref[...]                            # (BB, Hs)     f32 state
  h_c = h.astype(cdt)

  # prev_hidden_proj = h2h(h), broadcast over the time axis below.
  hproj = (jnp.dot(h_c, h2h_wT_ref[...], preferred_element_type=jnp.float32)
           + h2h_b_ref[...])                # (BB, Hs) f32
  sw = score_w_ref[...].reshape(1, 1, Hs)   # (1, 1, Hs) f32
  act_dt = cdt if bf16_activations else jnp.float32

  # --- attention scores, chunked over time so only (BB, Tc, Hs) is live ---
  e_chunks = []
  for t0 in range(0, Tp, time_chunk):
    Hc = H[:, t0:t0 + time_chunk, :]                         # (BB, Tc, D) cdt
    proj = jnp.dot(Hc.reshape(BB * time_chunk, D), i2h_wT_ref[...],
                   preferred_element_type=jnp.float32
                   ).reshape(BB, time_chunk, Hs)             # f32
    tch = jnp.tanh((proj + hproj[:, None, :]).astype(act_dt))
    # score(...) has out-features == 1: VPU multiply + lane reduce instead of a
    # lane-sparse N=1 MXU pass.
    e_chunks.append(jnp.sum(tch.astype(jnp.float32) * sw, axis=-1))  # (BB, Tc)
  e = e_chunks[0] if len(e_chunks) == 1 else jnp.concatenate(e_chunks, axis=-1)

  # Mask padded time steps so their softmax weight is exactly zero.
  if t_valid < Tp:
    col = jax.lax.broadcasted_iota(jnp.int32, (BB, Tp), 1)
    e = jnp.where(col < t_valid, e, jnp.float32(-1e30))

  # softmax over the time axis (f32, lane-dense rows).
  e_max = jnp.max(e, axis=-1, keepdims=True)
  p = jnp.exp(e - e_max)
  denom = jnp.sum(p, axis=-1, keepdims=True)
  if exact_div:
    alpha = p / denom
  else:
    inv = pl.reciprocal(denom, approx=True)
    inv = inv * (2.0 - denom * inv)          # one Newton step -> near-exact
    alpha = p * inv
  alpha_ref[...] = alpha                     # (BB, Tp)

  # context = sum_t alpha[b,t] * H[b,t,:]  (implicit promote to f32 inside the
  # multiply; no explicit f32 copy of H).
  context = jnp.sum(alpha[:, :, None] * H, axis=1)           # (BB, D) f32

  # --- LSTM cell: single fused MXU pass over concat([context, h]).  The
  # one-hot contribution and both biases arrive precomputed in ohg_b_ref. ---
  xcat = jnp.concatenate([context.astype(cdt), h_c], axis=-1)   # (BB, D+Hs)
  gates = (jnp.dot(xcat, w_catT_ref[...], preferred_element_type=jnp.float32)
           + ohg_b_ref[...])                                    # (BB, 4*Hs) f32

  i_g = jax.nn.sigmoid(gates[:, 0 * Hs:1 * Hs])
  f_g = jax.nn.sigmoid(gates[:, 1 * Hs:2 * Hs])
  g_g = jnp.tanh(gates[:, 2 * Hs:3 * Hs])
  o_g = jax.nn.sigmoid(gates[:, 3 * Hs:4 * Hs])

  c_new = f_g * c + i_g * g_g
  h_new = o_g * jnp.tanh(c_new)

  h_out_ref[...] = h_new
  c_out_ref[...] = c_new


def _choose_block_batch(B):
  """BB is a multiple of 8 (sublane-dense f32 blocks), capped at 64 to bound
  per-step VMEM; small batches collapse to a single padded grid step."""
  return min(64, _round_up(max(B, 1), 8))


def _choose_time_chunk(Tp, cap=32):
  """Largest multiple-of-8 divisor of Tp that is <= cap (Tp is a mult. of 8)."""
  tc = max(8, min(Tp, (cap // 8) * 8))
  while Tp % tc:
    tc -= 8
  return tc


def attention_cell(prev_hidden, batch_H, char_onehots, params,
                   *, block_batch=None, use_bf16=True, bf16_activations=False):
  """Pallas implementation of AttentionCell.forward.

  prev_hidden:  tuple (h, c), each (B, Hs) float32
  batch_H:      (B, T, D)
  char_onehots: (B, E)
  returns ((h_new, c_new), alpha) with alpha (B, T, 1), matching PyTorch.
  """
  prev_h, prev_c = prev_hidden
  B, T, D = batch_H.shape
  Hs = params["h2h_w"].shape[0]
  E = char_onehots.shape[1]
  assert params["w_ih"].shape[1] == D + E

  BB = block_batch if block_batch is not None else _choose_block_batch(B)
  n_steps = pl.cdiv(B, BB)
  Bp = n_steps * BB
  Tp = _round_up(T, 8)
  TC = _choose_time_chunk(Tp)
  cdt = jnp.bfloat16 if use_bf16 else jnp.float32

  w_ih = params["w_ih"].astype(jnp.float32)                # (4Hs, D+E)
  w_hh = params["w_hh"].astype(jnp.float32)                # (4Hs, Hs)

  # --- per-batch inputs: 2-D (B, X) slabs (batch -> sublanes, features -> lanes) ---
  h2 = prev_h.astype(jnp.float32)
  c2 = prev_c.astype(jnp.float32)
  # One-hot gate contribution (a row gather) + both LSTM biases, hoisted to XLA.
  ohg_b = (char_onehots.astype(jnp.float32) @ w_ih[:, D:].T
           + params["b_ih"].astype(jnp.float32)
           + params["b_hh"].astype(jnp.float32))            # (B, 4Hs) f32
  bH = batch_H.astype(cdt)

  pad_b, pad_t = Bp - B, Tp - T
  if pad_b or pad_t:
    h2 = jnp.pad(h2, ((0, pad_b), (0, 0)))
    c2 = jnp.pad(c2, ((0, pad_b), (0, 0)))
    ohg_b = jnp.pad(ohg_b, ((0, pad_b), (0, 0)))
    bH = jnp.pad(bH, ((0, pad_b), (0, pad_t), (0, 0)))

  # --- weights: pre-transposed so every in-kernel dot is A @ W ---
  i2h_wT = params["i2h_w"].T.astype(cdt)                    # (D, Hs)
  h2h_wT = params["h2h_w"].T.astype(cdt)                    # (Hs, Hs)
  h2h_b = params["h2h_b"].reshape(1, Hs).astype(jnp.float32)
  score_w = params["score_w"].reshape(1, Hs).astype(jnp.float32)
  # Fused gate weight: rows = [context features ; hidden features].
  w_catT = jnp.concatenate([w_ih[:, :D].T, w_hh.T], axis=0).astype(cdt)  # (D+Hs, 4Hs)

  kernel = functools.partial(
      _attention_cell_kernel, hidden_size=Hs, t_valid=T, time_chunk=TC,
      bf16_activations=bool(bf16_activations and use_bf16),
      exact_div=not use_bf16)

  per_b2 = lambda i: (i, 0)
  per_b3 = lambda i: (i, 0, 0)
  full2 = lambda i: (0, 0)

  flops = n_steps * (2 * BB * Tp * D * Hs          # i2h projection
                     + 2 * BB * Hs * Hs            # h2h projection
                     + 2 * BB * Tp * D             # context reduction
                     + 2 * BB * (D + Hs) * 4 * Hs)  # fused gate matmul
  transcendentals = n_steps * (BB * Tp * Hs + BB * Tp + 4 * BB * Hs)
  bytes_accessed = int(sum(int(x.size) * x.dtype.itemsize for x in
                           (h2, c2, bH, ohg_b, i2h_wT, h2h_wT, h2h_b,
                            score_w, w_catT))
                       + (2 * Bp * Hs + Bp * Tp) * 4)

  h_new2, c_new2, alpha2 = pl.pallas_call(
      kernel,
      grid=(n_steps,),
      in_specs=[
          pl.BlockSpec((BB, Hs), per_b2),          # prev h
          pl.BlockSpec((BB, Hs), per_b2),          # prev c
          pl.BlockSpec((BB, Tp, D), per_b3),       # batch_H (time-padded)
          pl.BlockSpec((BB, 4 * Hs), per_b2),      # one-hot gate term + biases
          pl.BlockSpec((D, Hs), full2),            # i2h weight (T)
          pl.BlockSpec((Hs, Hs), full2),           # h2h weight (T)
          pl.BlockSpec((1, Hs), full2),            # h2h bias
          pl.BlockSpec((1, Hs), full2),            # score weight
          pl.BlockSpec((D + Hs, 4 * Hs), full2),   # fused [W_ih_ctx ; W_hh] (T)
      ],
      out_specs=[
          pl.BlockSpec((BB, Hs), per_b2),          # h_new
          pl.BlockSpec((BB, Hs), per_b2),          # c_new
          pl.BlockSpec((BB, Tp), per_b2),          # alpha, lane-dense (time on lanes)
      ],
      out_shape=[
          jax.ShapeDtypeStruct((Bp, Hs), jnp.float32),
          jax.ShapeDtypeStruct((Bp, Hs), jnp.float32),
          jax.ShapeDtypeStruct((Bp, Tp), jnp.float32),
      ],
      compiler_params=pltpu.CompilerParams(dimension_semantics=("parallel",)),
      cost_estimate=pl.CostEstimate(flops=flops,
                                    transcendentals=transcendentals,
                                    bytes_accessed=bytes_accessed),
  )(h2, c2, bH, ohg_b, i2h_wT, h2h_wT, h2h_b, score_w, w_catT)

  h_new = h_new2[:B]
  c_new = c_new2[:B]
  alpha = alpha2[:B, :T][:, :, None]               # back to PyTorch (B, T, 1)
  return (h_new, c_new), alpha


def attention_cell_reference(prev_hidden, batch_H, char_onehots, params):
  """Pure-JAX f32 reference mirroring the PyTorch forward."""
  prev_h, prev_c = prev_hidden
  proj = batch_H @ params["i2h_w"].T
  hproj = (prev_h @ params["h2h_w"].T + params["h2h_b"])[:, None, :]
  e = jnp.tanh(proj + hproj) @ params["score_w"].T          # (B, T, 1)
  alpha = jax.nn.softmax(e, axis=1)
  context = jnp.einsum("bti,btd->bd", alpha, batch_H)
  concat = jnp.concatenate([context, char_onehots], axis=1)
  gates = (concat @ params["w_ih"].T + params["b_ih"]
           + prev_h @ params["w_hh"].T + params["b_hh"])
  i, f, g, o = jnp.split(gates, 4, axis=1)
  c_new = jax.nn.sigmoid(f) * prev_c + jax.nn.sigmoid(i) * jnp.tanh(g)
  h_new = jax.nn.sigmoid(o) * jnp.tanh(c_new)
  return (h_new, c_new), alpha


def init_params(key, input_size, hidden_size, num_embeddings):
  """Deterministic parameter init (PyTorch-style uniform(-1/sqrt(fan), ...))."""
  ks = jax.random.split(key, 8)
  Hs, D, E = hidden_size, input_size, num_embeddings

  def u(k, shape, fan):
    bound = 1.0 / np.sqrt(fan)
    return jax.random.uniform(k, shape, jnp.float32, -bound, bound)

  return {
      "i2h_w": u(ks[0], (Hs, D), D),            # Linear(input_size, hidden, bias=False)
      "h2h_w": u(ks[1], (Hs, Hs), Hs),          # Linear(hidden, hidden)
      "h2h_b": u(ks[2], (Hs,), Hs),
      "score_w": u(ks[3], (1, Hs), Hs),         # Linear(hidden, 1, bias=False)
      "w_ih": u(ks[4], (4 * Hs, D + E), Hs),    # CustomLSTMCell (new_chars=0)
      "w_hh": u(ks[5], (4 * Hs, Hs), Hs),
      "b_ih": u(ks[6], (4 * Hs,), Hs),
      "b_hh": u(ks[7], (4 * Hs,), Hs),
  }


if __name__ == "__main__":
  B, T, D, Hs, E = 2, 8, 32, 32, 16   # batch, seq, input_size, hidden, num_embeddings

  key = jax.random.PRNGKey(0)
  k_p, k_h, k_c, k_H, k_e = jax.random.split(key, 5)

  params = init_params(k_p, D, Hs, E)
  prev_h = jax.random.normal(k_h, (B, Hs), jnp.float32)
  prev_c = jax.random.normal(k_c, (B, Hs), jnp.float32)
  batch_H = jax.random.normal(k_H, (B, T, D), jnp.float32)
  char_ids = jax.random.randint(k_e, (B,), 0, E)
  char_onehots = jax.nn.one_hot(char_ids, E, dtype=jnp.float32)

  (h_ref, c_ref), alpha_ref = attention_cell_reference(
      (prev_h, prev_c), batch_H, char_onehots, params)

  # f32 operand path (exact softmax divide): structural correctness, tight tol.
  (h_f32, c_f32), alpha_f32 = attention_cell(
      (prev_h, prev_c), batch_H, char_onehots, params, use_bf16=False)
  jax.block_until_ready((h_f32, c_f32, alpha_f32))
  np.testing.assert_allclose(np.asarray(h_f32), np.asarray(h_ref), rtol=1e-4, atol=1e-4)
  np.testing.assert_allclose(np.asarray(c_f32), np.asarray(c_ref), rtol=1e-4, atol=1e-4)
  np.testing.assert_allclose(np.asarray(alpha_f32), np.asarray(alpha_ref), rtol=1e-4, atol=1e-4)

  # bf16 MXU-operand fast path (f32 accumulation/state): loosened tolerance.
  (h_new, c_new), alpha = attention_cell(
      (prev_h, prev_c), batch_H, char_onehots, params, use_bf16=True)
  jax.block_until_ready((h_new, c_new, alpha))
  np.testing.assert_allclose(np.asarray(h_new), np.asarray(h_ref), rtol=5e-2, atol=5e-2)
  np.testing.assert_allclose(np.asarray(c_new), np.asarray(c_ref), rtol=5e-2, atol=5e-2)
  np.testing.assert_allclose(np.asarray(alpha), np.asarray(alpha_ref), rtol=5e-2, atol=5e-2)

  print("KERNEL_OK")
</pallas_src>

<mosaic_0001>
module attributes {stable_mosaic.version = 11 : i64} {
  func.func @_attention_cell_kernel(%arg0: i32, %arg1: memref<8x32xf32, #tpu.memory_space<vmem>>, %arg2: memref<8x32xf32, #tpu.memory_space<vmem>>, %arg3: memref<8x8x32xf32, #tpu.memory_space<vmem>>, %arg4: memref<8x128xf32, #tpu.memory_space<vmem>>, %arg5: memref<32x32xf32, #tpu.memory_space<vmem>>, %arg6: memref<32x32xf32, #tpu.memory_space<vmem>>, %arg7: memref<1x32xf32, #tpu.memory_space<vmem>>, %arg8: memref<1x32xf32, #tpu.memory_space<vmem>>, %arg9: memref<64x128xf32, #tpu.memory_space<vmem>>, %arg10: memref<8x32xf32, #tpu.memory_space<vmem>>, %arg11: memref<8x32xf32, #tpu.memory_space<vmem>>, %arg12: memref<8x8xf32, #tpu.memory_space<vmem>>) attributes {dimension_semantics = [#tpu.dimension_semantics<parallel>], iteration_bounds = array<i64: 1>, scalar_prefetch = 0 : i64, scratch_operands = 0 : i64, tpu.core_type = #tpu.core_type<tc>, window_params = [{transform_indices = @transform_0, window_bounds = array<i64: 8, 32>}, {transform_indices = @transform_1, window_bounds = array<i64: 8, 32>}, {transform_indices = @transform_2, window_bounds = array<i64: 8, 8, 32>}, {transform_indices = @transform_3, window_bounds = array<i64: 8, 128>}, {pipeline_mode = #tpu.pipeline_mode<synchronous>, transform_indices = @transform_4, window_bounds = array<i64: 32, 32>}, {pipeline_mode = #tpu.pipeline_mode<synchronous>, transform_indices = @transform_5, window_bounds = array<i64: 32, 32>}, {pipeline_mode = #tpu.pipeline_mode<synchronous>, transform_indices = @transform_6, window_bounds = array<i64: 1, 32>}, {pipeline_mode = #tpu.pipeline_mode<synchronous>, transform_indices = @transform_7, window_bounds = array<i64: 1, 32>}, {pipeline_mode = #tpu.pipeline_mode<synchronous>, transform_indices = @transform_8, window_bounds = array<i64: 64, 128>}, {transform_indices = @transform_9, window_bounds = array<i64: 8, 32>}, {transform_indices = @transform_10, window_bounds = array<i64: 8, 32>}, {transform_indices = @transform_11, window_bounds = array<i64: 8, 8>}]} {
    %c0 = arith.constant 0 : index
    %c0_0 = arith.constant 0 : index
    %c0_1 = arith.constant 0 : index
    %0 = vector.load %arg3[%c0, %c0_0, %c0_1] : memref<8x8x32xf32, #tpu.memory_space<vmem>>, vector<8x8x32xf32>
    %c0_2 = arith.constant 0 : index
    %c0_3 = arith.constant 0 : index
    %1 = vector.load %arg1[%c0_2, %c0_3] : memref<8x32xf32, #tpu.memory_space<vmem>>, vector<8x32xf32>
    %c0_4 = arith.constant 0 : index
    %c0_5 = arith.constant 0 : index
    %2 = vector.load %arg2[%c0_4, %c0_5] : memref<8x32xf32, #tpu.memory_space<vmem>>, vector<8x32xf32>
    %c0_6 = arith.constant 0 : index
    %c0_7 = arith.constant 0 : index
    %3 = vector.load %arg6[%c0_6, %c0_7] : memref<32x32xf32, #tpu.memory_space<vmem>>, vector<32x32xf32>
    %cst = arith.constant dense<0.000000e+00> : vector<8x32xf32>
    %4 = tpu.matmul %1, %3, %cst {dimension_numbers = #tpu.dot_dimension_numbers<[1], [0], [0], [1], [0, 0, 1, 1], [], []>} : vector<8x32xf32>, vector<32x32xf32>, vector<8x32xf32> -> vector<8x32xf32>
    %c0_8 = arith.constant 0 : index
    %c0_9 = arith.constant 0 : index
    %5 = vector.load %arg7[%c0_8, %c0_9] : memref<1x32xf32, #tpu.memory_space<vmem>>, vector<1x32xf32>
    %6 = vector.broadcast %5 : vector<1x32xf32> to vector<8x32xf32>
    %7 = arith.addf %4, %6 : vector<8x32xf32>
    %c0_10 = arith.constant 0 : index
    %c0_11 = arith.constant 0 : index
    %8 = vector.load %arg8[%c0_10, %c0_11] : memref<1x32xf32, #tpu.memory_space<vmem>>, vector<1x32xf32>
    %9 = vector.shape_cast %8 : vector<1x32xf32> to vector<1x1x32xf32>
    %10 = vector.shape_cast %0 : vector<8x8x32xf32> to vector<64x32xf32>
    %c0_12 = arith.constant 0 : index
    %c0_13 = arith.constant 0 : index
    %11 = vector.load %arg5[%c0_12, %c0_13] : memref<32x32xf32, #tpu.memory_space<vmem>>, vector<32x32xf32>
    %cst_14 = arith.constant dense<0.000000e+00> : vector<64x32xf32>
    %12 = tpu.matmul %10, %11, %cst_14 {dimension_numbers = #tpu.dot_dimension_numbers<[1], [0], [0], [1], [0, 0, 1, 1], [], []>} : vector<64x32xf32>, vector<32x32xf32>, vector<64x32xf32> -> vector<64x32xf32>
    %13 = vector.shape_cast %12 : vector<64x32xf32> to vector<8x8x32xf32>
    %14 = vector.shape_cast %7 : vector<8x32xf32> to vector<8x1x32xf32>
    %15 = vector.broadcast %14 : vector<8x1x32xf32> to vector<8x8x32xf32>
    %16 = arith.addf %13, %15 : vector<8x8x32xf32>
    %17 = math.tanh %16 : vector<8x8x32xf32>
    %18 = vector.broadcast %9 : vector<1x1x32xf32> to vector<8x8x32xf32>
    %19 = arith.mulf %17, %18 : vector<8x8x32xf32>
    %cst_15 = arith.constant dense<0.000000e+00> : vector<8x8xf32>
    %20 = vector.multi_reduction <add>, %19, %cst_15 [2] : vector<8x8x32xf32> to vector<8x8xf32>
    %cst_16 = arith.constant dense<0xFF800000> : vector<8xf32>
    %21 = vector.multi_reduction <maximumf>, %20, %cst_16 [1] : vector<8x8xf32> to vector<8xf32>
    %22 = vector.shape_cast %21 : vector<8xf32> to vector<8x1xf32>
    %23 = vector.broadcast %22 : vector<8x1xf32> to vector<8x8xf32>
    %24 = arith.subf %20, %23 : vector<8x8xf32>
    %25 = math.exp %24 : vector<8x8xf32>
    %cst_17 = arith.constant dense<0.000000e+00> : vector<8xf32>
    %26 = vector.multi_reduction <add>, %25, %cst_17 [1] : vector<8x8xf32> to vector<8xf32>
    %27 = vector.shape_cast %26 : vector<8xf32> to vector<8x1xf32>
    %28 = vector.broadcast %27 : vector<8x1xf32> to vector<8x8xf32>
    %29 = arith.divf %25, %28 : vector<8x8xf32>
    %c0_18 = arith.constant 0 : index
    %c0_19 = arith.constant 0 : index
    %30 = vector.load %arg12[%c0_18, %c0_19] : memref<8x8xf32, #tpu.memory_space<vmem>>, vector<8x8xf32>
    tpu.vector_store %arg12[%c0_18, %c0_19], %29 {strides = array<i32>} : memref<8x8xf32, #tpu.memory_space<vmem>>, vector<8x8xf32>,
    %31 = vector.shape_cast %29 : vector<8x8xf32> to vector<8x8x1xf32>
    %32 = vector.broadcast %31 : vector<8x8x1xf32> to vector<8x8x32xf32>
    %33 = arith.mulf %32, %0 : vector<8x8x32xf32>
    %cst_20 = arith.constant dense<0.000000e+00> : vector<8x32xf32>
    %34 = vector.multi_reduction <add>, %33, %cst_20 [1] : vector<8x8x32xf32> to vector<8x32xf32>
    %35 = tpu.concatenate %34, %1 in 1 : vector<8x32xf32>, vector<8x32xf32> -> vector<8x64xf32>
    %c0_21 = arith.constant 0 : index
    %c0_22 = arith.constant 0 : index
    %36 = vector.load %arg9[%c0_21, %c0_22] : memref<64x128xf32, #tpu.memory_space<vmem>>, vector<64x128xf32>
    %cst_23 = arith.constant dense<0.000000e+00> : vector<8x128xf32>
    %37 = tpu.matmul %35, %36, %cst_23 {dimension_numbers = #tpu.dot_dimension_numbers<[1], [0], [0], [1], [0, 0, 1, 1], [], []>} : vector<8x64xf32>, vector<64x128xf32>, vector<8x128xf32> -> vector<8x128xf32>
    %c0_24 = arith.constant 0 : index
    %c0_25 = arith.constant 0 : index
    %38 = vector.load %arg4[%c0_24, %c0_25] : memref<8x128xf32, #tpu.memory_space<vmem>>, vector<8x128xf32>
    %39 = arith.addf %37, %38 : vector<8x128xf32>
    %40 = vector.extract_strided_slice %39 {offsets = [0, 0], sizes = [8, 32], strides = [1, 1]} : vector<8x128xf32> to vector<8x32xf32>
    %41 = arith.negf %40 : vector<8x32xf32>
    %42 = math.exp %41 : vector<8x32xf32>
    %cst_26 = arith.constant 1.000000e+00 : f32
    %43 = vector.broadcast %cst_26 : f32 to vector<8x32xf32>
    %44 = arith.addf %43, %42 : vector<8x32xf32>
    %45 = arith.divf %43, %44 : vector<8x32xf32>
    %46 = vector.extract_strided_slice %39 {offsets = [0, 32], sizes = [8, 32], strides = [1, 1]} : vector<8x128xf32> to vector<8x32xf32>
    %47 = arith.negf %46 : vector<8x32xf32>
    %48 = math.exp %47 : vector<8x32xf32>
    %cst_27 = arith.constant 1.000000e+00 : f32
    %49 = vector.broadcast %cst_27 : f32 to vector<8x32xf32>
    %50 = arith.addf %49, %48 : vector<8x32xf32>
    %51 = arith.divf %49, %50 : vector<8x32xf32>
    %52 = vector.extract_strided_slice %39 {offsets = [0, 64], sizes = [8, 32], strides = [1, 1]} : vector<8x128xf32> to vector<8x32xf32>
    %53 = math.tanh %52 : vector<8x32xf32>
    %54 = vector.extract_strided_slice %39 {offsets = [0, 96], sizes = [8, 32], strides = [1, 1]} : vector<8x128xf32> to vector<8x32xf32>
    %55 = arith.negf %54 : vector<8x32xf32>
    %56 = math.exp %55 : vector<8x32xf32>
    %cst_28 = arith.constant 1.000000e+00 : f32
    %57 = vector.broadcast %cst_28 : f32 to vector<8x32xf32>
    %58 = arith.addf %57, %56 : vector<8x32xf32>
    %59 = arith.divf %57, %58 : vector<8x32xf32>
    %60 = arith.mulf %51, %2 : vector<8x32xf32>
    %61 = arith.mulf %45, %53 : vector<8x32xf32>
    %62 = arith.addf %60, %61 : vector<8x32xf32>
    %63 = math.tanh %62 : vector<8x32xf32>
    %64 = arith.mulf %59, %63 : vector<8x32xf32>
    %c0_29 = arith.constant 0 : index
    %c0_30 = arith.constant 0 : index
    %65 = vector.load %arg10[%c0_29, %c0_30] : memref<8x32xf32, #tpu.memory_space<vmem>>, vector<8x32xf32>
    tpu.vector_store %arg10[%c0_29, %c0_30], %64 {strides = array<i32>} : memref<8x32xf32, #tpu.memory_space<vmem>>, vector<8x32xf32>,
    %c0_31 = arith.constant 0 : index
    %c0_32 = arith.constant 0 : index
    %66 = vector.load %arg11[%c0_31, %c0_32] : memref<8x32xf32, #tpu.memory_space<vmem>>, vector<8x32xf32>
    tpu.vector_store %arg11[%c0_31, %c0_32], %62 {strides = array<i32>} : memref<8x32xf32, #tpu.memory_space<vmem>>, vector<8x32xf32>,
    return
  }
  func.func @transform_0(%arg0: i32) -> (i32, i32) {
    %c0_i32 = arith.constant 0 : i32
    %c0_i32_0 = arith.constant 0 : i32
    return %arg0, %c0_i32 : i32, i32
  }
  func.func @transform_1(%arg0: i32) -> (i32, i32) {
    %c0_i32 = arith.constant 0 : i32
    %c0_i32_0 = arith.constant 0 : i32
    return %arg0, %c0_i32 : i32, i32
  }
  func.func @transform_2(%arg0: i32) -> (i32, i32, i32) {
    %c0_i32 = arith.constant 0 : i32
    %c0_i32_0 = arith.constant 0 : i32
    %c0_i32_1 = arith.constant 0 : i32
    return %arg0, %c0_i32, %c0_i32_0 : i32, i32, i32
  }
  func.func @transform_3(%arg0: i32) -> (i32, i32) {
    %c0_i32 = arith.constant 0 : i32
    %c0_i32_0 = arith.constant 0 : i32
    return %arg0, %c0_i32 : i32, i32
  }
  func.func @transform_4(%arg0: i32) -> (i32, i32) {
    %c0_i32 = arith.constant 0 : i32
    %c0_i32_0 = arith.constant 0 : i32
    %c0_i32_1 = arith.constant 0 : i32
    return %c0_i32, %c0_i32_0 : i32, i32
  }
  func.func @transform_5(%arg0: i32) -> (i32, i32) {
    %c0_i32 = arith.constant 0 : i32
    %c0_i32_0 = arith.constant 0 : i32
    %c0_i32_1 = arith.constant 0 : i32
    return %c0_i32, %c0_i32_0 : i32, i32
  }
  func.func @transform_6(%arg0: i32) -> (i32, i32) {
    %c0_i32 = arith.constant 0 : i32
    %c0_i32_0 = arith.constant 0 : i32
    %c0_i32_1 = arith.constant 0 : i32
    return %c0_i32, %c0_i32_0 : i32, i32
  }
  func.func @transform_7(%arg0: i32) -> (i32, i32) {
    %c0_i32 = arith.constant 0 : i32
    %c0_i32_0 = arith.constant 0 : i32
    %c0_i32_1 = arith.constant 0 : i32
    return %c0_i32, %c0_i32_0 : i32, i32
  }
  func.func @transform_8(%arg0: i32) -> (i32, i32) {
    %c0_i32 = arith.constant 0 : i32
    %c0_i32_0 = arith.constant 0 : i32
    %c0_i32_1 = arith.constant 0 : i32
    return %c0_i32, %c0_i32_0 : i32, i32
  }
  func.func @transform_9(%arg0: i32) -> (i32, i32) {
    %c0_i32 = arith.constant 0 : i32
    %c0_i32_0 = arith.constant 0 : i32
    return %arg0, %c0_i32 : i32, i32
  }
  func.func @transform_10(%arg0: i32) -> (i32, i32) {
    %c0_i32 = arith.constant 0 : i32
    %c0_i32_0 = arith.constant 0 : i32
    return %arg0, %c0_i32 : i32, i32
  }
  func.func @transform_11(%arg0: i32) -> (i32, i32) {
    %c0_i32 = arith.constant 0 : i32
    %c0_i32_0 = arith.constant 0 : i32
    return %arg0, %c0_i32 : i32, i32
  }
}

</mosaic_0001>

<llo_original>
// kernel: tpu_custom_call.1
$region0: #{tpu_custom_call.1}
  #allocation0 [shape = 'u32[]', space=smem, size = 0x4, offset = 0x4, fixed_abs, tag = 'smem constant byte address 0x4 - core index']
  #allocation1 [shape = 'u32[72,128]{1,0:T(1,128)}', space=vmem, size = 0x9000, scoped, tag = 'internal scratch']
  %s0 = inlined_call_operand.hbm [shape: f32[8,32], index: 0, kind: input, shape index: {}]
  %s1 = inlined_call_operand.hbm [shape: f32[8,32], index: 1, kind: input, shape index: {}]
  %s2 = inlined_call_operand.hbm [shape: f32[8,8,32], index: 2, kind: input, shape index: {}]
  %s3 = inlined_call_operand.hbm [shape: f32[8,128], index: 3, kind: input, shape index: {}]
  %s4 = inlined_call_operand.hbm [shape: f32[32,32], index: 4, kind: input, shape index: {}]
  %s5 = inlined_call_operand.hbm [shape: f32[32,32], index: 5, kind: input, shape index: {}]
  %s6 = inlined_call_operand.vmem [shape: f32[1,32], index: 6, kind: input, shape index: {}]
  %s7 = inlined_call_operand.vmem [shape: f32[1,32], index: 7, kind: input, shape index: {}]
  %s8 = inlined_call_operand.hbm [shape: f32[64,128], index: 8, kind: input, shape index: {}]
  %s9 = inlined_call_operand.hbm [shape: f32[8,32], index: 9, kind: output, shape index: {0}]
  %s10 = inlined_call_operand.hbm [shape: f32[8,32], index: 10, kind: output, shape index: {1}]
  %s11 = inlined_call_operand.hbm [shape: f32[8,8], index: 11, kind: output, shape index: {2}]
  %12 = xla_tuple %s9, %s10, %s11
  %s13 = sld [smem:[#allocation0]]
  $region90: #{tpu_custom_call.1} parent=0
    _
  %s15 = ssub.s32 1, %s13
  %s16 = scalar_select 0, %s15, %s13
  $region1: #{tpu_custom_call.1} parent=0
    #allocation2 [shape = 'u8[4096]{0}', space=vmem, size = 0x1000, scoped, tag = 'input window, operand 0, single buffered']
    #allocation3 [shape = 's32[1]{0}', space=sflag, size = 0x4, scoped, tag = 'scoped memory for tpu_custom_call.1']
    #allocation4 [shape = 's32[1]{0}', space=sflag, size = 0x4, scoped, tag = 'scoped memory for tpu_custom_call.1']
    #allocation5 [shape = 'u8[4096]{0}', space=vmem, size = 0x1000, scoped, tag = 'input window, operand 1, single buffered']
    #allocation6 [shape = 's32[1]{0}', space=sflag, size = 0x4, scoped, tag = 'scoped memory for tpu_custom_call.1']
    #allocation7 [shape = 'u8[32768]{0}', space=vmem, size = 0x8000, scoped, tag = 'input window, operand 2, single buffered']
    #allocation8 [shape = 'u8[4096]{0}', space=vmem, size = 0x1000, scoped, tag = 'input window, operand 3, single buffered']
    #allocation9 [shape = 's32[1]{0}', space=sflag, size = 0x4, scoped, tag = 'scoped memory for tpu_custom_call.1']
    #allocation10 [shape = 'u8[16384]{0}', space=vmem, size = 0x4000, scoped, tag = 'input window, operand 4, single buffered']
    #allocation11 [shape = 'u8[16384]{0}', space=vmem, size = 0x4000, scoped, tag = 'input window, operand 5, single buffered']
    #allocation12 [shape = 's32[1]{0}', space=sflag, size = 0x4, scoped, tag = 'scoped memory for tpu_custom_call.1']
    #allocation13 [shape = 'u8[32768]{0}', space=vmem, size = 0x8000, scoped, tag = 'input window, operand 8, single buffered']
    #allocation14 [shape = 'u8[4096]{0}', space=vmem, size = 0x1000, scoped, tag = 'output window, operand 0, single buffered']
    #allocation15 [shape = 'u8[4096]{0}', space=vmem, size = 0x1000, scoped, tag = 'output window, operand 1, single buffered']
    #allocation16 [shape = 's32[1]{0}', space=sflag, size = 0x4, scoped, tag = 'scoped memory for tpu_custom_call.1']
    #allocation17 [shape = 'u8[4096]{0}', space=vmem, size = 0x1000, scoped, tag = 'output window, operand 2, single buffered']
    %17 = vsyncpa [#allocation3], 0
    %18 = vsyncpa [#allocation6], 0
    %19 = vsyncpa [#allocation9], 0
    %20 = vsyncpa [#allocation12], 0
    %21 = vsyncpa [#allocation4], 0
    %22 = vsyncpa [#allocation16], 0
    // Predicated region
    $region2: #{tpu_custom_call.1} parent=1 // pred_check
      _
    $region3: #{tpu_custom_call.1} parent=1 // pred_check_branch
      %24 = sbr.rel (0) target = $region5
    $region4: #{tpu_custom_call.1} parent=1 // pred_region
      %26 = vsyncadd [#allocation3], 0
      %s28 = sshll.u32 %s0, 4
      %s29 = int_to_ptr.hbm [resolvable:$true] %s28
      %s30 = sshll.u32 [#allocation2], 4
      %s31 = int_to_ptr.vmem [resolvable:$true] %s30
      %33 = dma.hbm_to_vmem [thread:$0]  %s29, 128, %s31, [#allocation3]
    $region5: #{tpu_custom_call.1} parent=1 // pred_fallthru
      _
    // Predicated region
    $region6: #{tpu_custom_call.1} parent=1 // pred_check
      _
    $region7: #{tpu_custom_call.1} parent=1 // pred_check_branch
      %35 = sbr.rel (0) target = $region9
    $region8: #{tpu_custom_call.1} parent=1 // pred_region
      %37 = vsyncadd [#allocation6], 0
      %s39 = sshll.u32 %s1, 4
      %s40 = int_to_ptr.hbm [resolvable:$true] %s39
      %s41 = sshll.u32 [#allocation5], 4
      %s42 = int_to_ptr.vmem [resolvable:$true] %s41
      %44 = dma.hbm_to_vmem [thread:$0]  %s40, 128, %s42, [#allocation6]
    $region9: #{tpu_custom_call.1} parent=1 // pred_fallthru
      _
    // Predicated region
    $region10: #{tpu_custom_call.1} parent=1 // pred_check
      _
    $region11: #{tpu_custom_call.1} parent=1 // pred_check_branch
      %46 = sbr.rel (0) target = $region13
    $region12: #{tpu_custom_call.1} parent=1 // pred_region
      %48 = vsyncadd [#allocation6], 0
      %s49 = sshll.u32 %s2, 4
      %s50 = int_to_ptr.hbm [resolvable:$true] %s49
      %s51 = sshll.u32 [#allocation7], 4
      %s52 = int_to_ptr.vmem [resolvable:$true] %s51
      %57 = dma.hbm_to_vmem [thread:$0]  %s50, 1024, %s52, [#allocation6], 128, 128, 8
    $region13: #{tpu_custom_call.1} parent=1 // pred_fallthru
      _
    // Predicated region
    $region14: #{tpu_custom_call.1} parent=1 // pred_check
      _
    $region15: #{tpu_custom_call.1} parent=1 // pred_check_branch
      %59 = sbr.rel (0) target = $region17
    $region16: #{tpu_custom_call.1} parent=1 // pred_region
      %61 = vsyncadd [#allocation9], 0
      %s63 = sshll.u32 %s3, 4
      %s64 = int_to_ptr.hbm [resolvable:$true] %s63
      %s65 = sshll.u32 [#allocation8], 4
      %s66 = int_to_ptr.vmem [resolvable:$true] %s65
      %68 = dma.hbm_to_vmem [thread:$0]  %s64, 128, %s66, [#allocation9]
    $region17: #{tpu_custom_call.1} parent=1 // pred_fallthru
      _
    // Predicated region
    $region18: #{tpu_custom_call.1} parent=1 // pred_check
      _
    $region19: #{tpu_custom_call.1} parent=1 // pred_check_branch
      %70 = sbr.rel (0) target = $region21
    $region20: #{tpu_custom_call.1} parent=1 // pred_region
      %72 = vsyncadd [#allocation9], 0
      %s73 = sshll.u32 %s4, 4
      %s74 = int_to_ptr.hbm [resolvable:$true] %s73
      %s75 = sshll.u32 [#allocation10], 4
      %s76 = int_to_ptr.vmem [resolvable:$true] %s75
      %81 = dma.hbm_to_vmem [thread:$0]  %s74, 512, %s76, [#allocation9], 128, 128, 8
    $region21: #{tpu_custom_call.1} parent=1 // pred_fallthru
      _
    // Predicated region
    $region22: #{tpu_custom_call.1} parent=1 // pred_check
      _
    $region23: #{tpu_custom_call.1} parent=1 // pred_check_branch
      %83 = sbr.rel (0) target = $region25
    $region24: #{tpu_custom_call.1} parent=1 // pred_region
      %85 = vsyncadd [#allocation12], 0
      %s86 = sshll.u32 %s5, 4
      %s87 = int_to_ptr.hbm [resolvable:$true] %s86
      %s88 = sshll.u32 [#allocation11], 4
      %s89 = int_to_ptr.vmem [resolvable:$true] %s88
      %94 = dma.hbm_to_vmem [thread:$0]  %s87, 512, %s89, [#allocation12], 128, 128, 8
    $region25: #{tpu_custom_call.1} parent=1 // pred_fallthru
      _
    // Predicated region
    $region26: #{tpu_custom_call.1} parent=1 // pred_check
      _
    $region27: #{tpu_custom_call.1} parent=1 // pred_check_branch
      %96 = sbr.rel (0) target = $region29
    $region28: #{tpu_custom_call.1} parent=1 // pred_region
      _
    $region29: #{tpu_custom_call.1} parent=1 // pred_fallthru
      _
    // Predicated region
    $region30: #{tpu_custom_call.1} parent=1 // pred_check
      _
    $region31: #{tpu_custom_call.1} parent=1 // pred_check_branch
      %98 = sbr.rel (0) target = $region33
    $region32: #{tpu_custom_call.1} parent=1 // pred_region
      _
    $region33: #{tpu_custom_call.1} parent=1 // pred_fallthru
      _
    // Predicated region
    $region34: #{tpu_custom_call.1} parent=1 // pred_check
      _
    $region35: #{tpu_custom_call.1} parent=1 // pred_check_branch
      %100 = sbr.rel (0) target = $region37
    $region36: #{tpu_custom_call.1} parent=1 // pred_region
      %102 = vsyncadd [#allocation12], 0
      %s103 = sshll.u32 %s8, 4
      %s104 = int_to_ptr.hbm [resolvable:$true] %s103
      %s105 = sshll.u32 [#allocation13], 4
      %s106 = int_to_ptr.vmem [resolvable:$true] %s105
      %111 = dma.hbm_to_vmem [thread:$0]  %s104, 1024, %s106, [#allocation12], 128, 128, 8
    $region37: #{tpu_custom_call.1} parent=1 // pred_fallthru
      _
    // Predicated region
    $region38: #{tpu_custom_call.1} parent=1 // pred_check
      _
    $region39: #{tpu_custom_call.1} parent=1 // pred_check_branch
      %113 = sbr.rel (0) target = $region41
    $region40: #{tpu_custom_call.1} parent=1 // pred_region
      %115 = dma.done [#allocation3], 128
    $region41: #{tpu_custom_call.1} parent=1 // pred_fallthru
      _
    // Predicated region
    $region42: #{tpu_custom_call.1} parent=1 // pred_check
      _
    $region43: #{tpu_custom_call.1} parent=1 // pred_check_branch
      %117 = sbr.rel (0) target = $region45
    $region44: #{tpu_custom_call.1} parent=1 // pred_region
      %119 = dma.done [#allocation6], 128
    $region45: #{tpu_custom_call.1} parent=1 // pred_fallthru
      _
    // Predicated region
    $region46: #{tpu_custom_call.1} parent=1 // pred_check
      _
    $region47: #{tpu_custom_call.1} parent=1 // pred_check_branch
      %121 = sbr.rel (0) target = $region49
    $region48: #{tpu_custom_call.1} parent=1 // pred_region
      %123 = dma.done [#allocation6], 1024
    $region49: #{tpu_custom_call.1} parent=1 // pred_fallthru
      _
    // Predicated region
    $region50: #{tpu_custom_call.1} parent=1 // pred_check
      _
    $region51: #{tpu_custom_call.1} parent=1 // pred_check_branch
      %125 = sbr.rel (0) target = $region53
    $region52: #{tpu_custom_call.1} parent=1 // pred_region
      %127 = dma.done [#allocation9], 128
    $region53: #{tpu_custom_call.1} parent=1 // pred_fallthru
      _
    // Predicated region
    $region54: #{tpu_custom_call.1} parent=1 // pred_check
      _
    $region55: #{tpu_custom_call.1} parent=1 // pred_check_branch
      %129 = sbr.rel (0) target = $region57
    $region56: #{tpu_custom_call.1} parent=1 // pred_region
      %131 = dma.done [#allocation9], 512
    $region57: #{tpu_custom_call.1} parent=1 // pred_fallthru
      _
    // Predicated region
    $region58: #{tpu_custom_call.1} parent=1 // pred_check
      _
    $region59: #{tpu_custom_call.1} parent=1 // pred_check_branch
      %133 = sbr.rel (0) target = $region61
    $region60: #{tpu_custom_call.1} parent=1 // pred_region
      %135 = dma.done [#allocation12], 512
    $region61: #{tpu_custom_call.1} parent=1 // pred_fallthru
      _
    // Predicated region
    $region62: #{tpu_custom_call.1} parent=1 // pred_check
      _
    $region63: #{tpu_custom_call.1} parent=1 // pred_check_branch
      %137 = sbr.rel (0) target = $region65
    $region64: #{tpu_custom_call.1} parent=1 // pred_region
      %139 = dma.done [#allocation12], 1024
    $region65: #{tpu_custom_call.1} parent=1 // pred_fallthru
      _
    %v140 = vld [vmem:[#allocation7] sm:$0xff]
    %v141 = vld [vmem:[#allocation7 + $0x8] sm:$0xff]
    %v142 = vld [vmem:[#allocation7 + $0x10] sm:$0xff]
    %v143 = vld [vmem:[#allocation7 + $0x18] sm:$0xff]
    %v144 = vld [vmem:[#allocation7 + $0x20] sm:$0xff]
    %v145 = vld [vmem:[#allocation7 + $0x28] sm:$0xff]
    %v146 = vld [vmem:[#allocation7 + $0x30] sm:$0xff]
    %v147 = vld [vmem:[#allocation7 + $0x38] sm:$0xff]
    %v148 = vld [vmem:[#allocation2] sm:$0xff]
    %v149 = vld [vmem:[#allocation5] sm:$0xff]
    %v150 = vld [vmem:[#allocation11] sm:$0xff]
    %v151 = vld [vmem:[#allocation11 + $0x8] sm:$0xff]
    %v152 = vld [vmem:[#allocation11 + $0x10] sm:$0xff]
    %v153 = vld [vmem:[#allocation11 + $0x18] sm:$0xff]
    %v154 = vld [vmem:[%s6] sm:$0x1]
    %v156 = vperm.slane %v154, 0
    %vm158 = vcmask 261120
    %v160 = vsel %vm158, %v148, 0
    %162 = vmatpush.msra.mxu0 0.0
    %163 = vmatpush.msra.mxu0 0.0
    %164 = vmatpush.msra.mxu0 0.0
    %165 = vmatpush.msra.mxu0 0.0
    %166 = vmatpush.msra.mxu0 0.0
    %167 = vmatpush.msra.mxu0 0.0
    %168 = vmatpush.msra.mxu0 0.0
    %169 = vmatpush.msra.mxu0 0.0
    %170 = vmatpush.msra.mxu0 0.0
    %171 = vmatpush.msra.mxu0 0.0
    %172 = vmatpush.msra.mxu0 0.0
    %173 = vmatpush.msra.mxu0 0.0
    %174 = vmatpush.msra.mxu0 %v153
    %175 = vmatpush.msra.mxu0 %v152
    %176 = vmatpush.msra.mxu0 %v151
    %177 = vmatpush.msra.mxu0 %v150
    %178 = vmatmul.f32.gmra.mxu0 %v160
    %v179 = vpop.f32.mrf.mxu0
    %v180 = vadd.f32 %v156, %v179
    %181 = vdwg.mxu0
    %v182 = vld [vmem:[%s7] sm:$0x1]
    %v183 = vld [vmem:[#allocation10] sm:$0xff]
    %v184 = vld [vmem:[#allocation10 + $0x8] sm:$0xff]
    %v185 = vld [vmem:[#allocation10 + $0x10] sm:$0xff]
    %v186 = vld [vmem:[#allocation10 + $0x18] sm:$0xff]
    %v188 = vsel %vm158, %v140, 0
    %v191 = vsel %vm158, %v141, 0
    %v194 = vsel %vm158, %v142, 0
    %v197 = vsel %vm158, %v143, 0
    %v200 = vsel %vm158, %v144, 0
    %v203 = vsel %vm158, %v145, 0
    %v206 = vsel %vm158, %v146, 0
    %v209 = vsel %vm158, %v147, 0
    %211 = vmatpush.msra.mxu0 0.0
    %212 = vmatpush.msra.mxu0 0.0
    %213 = vmatpush.msra.mxu0 0.0
    %214 = vmatpush.msra.mxu0 0.0
    %215 = vmatpush.msra.mxu0 0.0
    %216 = vmatpush.msra.mxu0 0.0
    %217 = vmatpush.msra.mxu0 0.0
    %218 = vmatpush.msra.mxu0 0.0
    %219 = vmatpush.msra.mxu0 0.0
    %220 = vmatpush.msra.mxu0 0.0
    %221 = vmatpush.msra.mxu0 0.0
    %222 = vmatpush.msra.mxu0 0.0
    %223 = vmatpush.msra.mxu0 %v186
    %224 = vmatpush.msra.mxu0 %v185
    %225 = vmatpush.msra.mxu0 %v184
    %226 = vmatpush.msra.mxu0 %v183
    %227 = vmatmul.f32.gmra.mxu0 %v188
    %v228 = vpop.f32.mrf.mxu0
    %v229 = vadd.f32 0.0, %v228
    %230 = vmatmul.f32.gmra.mxu0 %v191
    %v231 = vpop.f32.mrf.mxu0
    %v232 = vadd.f32 0.0, %v231
    %233 = vmatmul.f32.gmra.mxu0 %v194
    %v234 = vpop.f32.mrf.mxu0
    %v235 = vadd.f32 0.0, %v234
    %236 = vmatmul.f32.gmra.mxu0 %v197
    %v237 = vpop.f32.mrf.mxu0
    %v238 = vadd.f32 0.0, %v237
    %239 = vmatmul.f32.gmra.mxu0 %v200
    %v240 = vpop.f32.mrf.mxu0
    %v241 = vadd.f32 0.0, %v240
    %242 = vmatmul.f32.gmra.mxu0 %v203
    %v243 = vpop.f32.mrf.mxu0
    %v244 = vadd.f32 0.0, %v243
    %245 = vmatmul.f32.gmra.mxu0 %v206
    %v246 = vpop.f32.mrf.mxu0
    %v247 = vadd.f32 0.0, %v246
    %248 = vmatmul.f32.gmra.mxu0 %v209
    %v249 = vpop.f32.mrf.mxu0
    %v250 = vadd.f32 0.0, %v249
    %251 = vdwg.mxu0
    %v253 = vrot.slane %v180, 1
    %v254 = vrot.slane %v180, 2
    %v255 = vrot.slane %v180, 3
    %v256 = vrot.slane %v180, 4
    %v257 = vrot.slane %v180, 5
    %v258 = vrot.slane %v180, 6
    %v259 = vrot.slane %v180, 7
    %v260 = vperm.slane %v180, 0
    %v261 = vperm.slane %v253, 0
    %v262 = vperm.slane %v254, 0
    %v263 = vperm.slane %v255, 0
    %v264 = vperm.slane %v256, 0
    %v265 = vperm.slane %v257, 0
    %v266 = vperm.slane %v258, 0
    %v267 = vperm.slane %v259, 0
    %v276 = vadd.f32 %v229, %v260
    %v277 = vadd.f32 %v232, %v261
    %v278 = vadd.f32 %v235, %v262
    %v279 = vadd.f32 %v238, %v263
    %v280 = vadd.f32 %v241, %v264
    %v281 = vadd.f32 %v244, %v265
    %v282 = vadd.f32 %v247, %v266
    %v283 = vadd.f32 %v250, %v267
    %v284 = vtanh.pop %v276
    %v285 = vtanh.pop %v277
    %v286 = vtanh.pop %v278
    %v287 = vtanh.pop %v279
    %v288 = vtanh.pop %v280
    %v289 = vtanh.pop %v281
    %v290 = vtanh.pop %v282
    %v291 = vtanh.pop %v283
    %v293 = vperm.slane %v182, 0
    %v295 = vmul.f32 %v284, %v293
    %v296 = vmul.f32 %v285, %v293
    %v297 = vmul.f32 %v286, %v293
    %v298 = vmul.f32 %v287, %v293
    %v299 = vmul.f32 %v288, %v293
    %v300 = vmul.f32 %v289, %v293
    %v301 = vmul.f32 %v290, %v293
    %v302 = vmul.f32 %v291, %v293
    %v303 = vsel %vm158, %v295, 0.0
    %304 = vadd.xlane.f32.xlu0 %v303
    %v305 = vpop.xlane.xlu0 %304
    %v306 = vsel %vm158, %v296, 0.0
    %307 = vadd.xlane.f32.xlu0 %v306
    %v308 = vpop.xlane.xlu0 %307
    %v309 = vsel %vm158, %v297, 0.0
    %310 = vadd.xlane.f32.xlu0 %v309
    %v311 = vpop.xlane.xlu0 %310
    %v312 = vsel %vm158, %v298, 0.0
    %313 = vadd.xlane.f32.xlu0 %v312
    %v314 = vpop.xlane.xlu0 %313
    %v315 = vsel %vm158, %v299, 0.0
    %316 = vadd.xlane.f32.xlu0 %v315
    %v317 = vpop.xlane.xlu0 %316
    %v318 = vsel %vm158, %v300, 0.0
    %319 = vadd.xlane.f32.xlu0 %v318
    %v320 = vpop.xlane.xlu0 %319
    %v321 = vsel %vm158, %v301, 0.0
    %322 = vadd.xlane.f32.xlu0 %v321
    %v323 = vpop.xlane.xlu0 %322
    %v324 = vsel %vm158, %v302, 0.0
    %325 = vadd.xlane.f32.xlu0 %v324
    %v326 = vpop.xlane.xlu0 %325
    %v335 = vlaneseq
    %v336 = vand.u32 %v335, 127
    %v337 = vperm.slane %v305, %v336
    %v338 = vperm.slane %v308, %v336
    %v339 = vperm.slane %v311, %v336
    %v340 = vperm.slane %v314, %v336
    %v341 = vperm.slane %v317, %v336
    %v342 = vperm.slane %v320, %v336
    %v343 = vperm.slane %v323, %v336
    %v344 = vperm.slane %v326, %v336
    %vm345 = vcmask 1041409
    %v346 = vsel %vm345, %v338, %v337
    %vm347 = vcmask 1042434
    %v348 = vsel %vm347, %v339, %v346
    %vm349 = vcmask 1043459
    %v350 = vsel %vm349, %v340, %v348
    %vm351 = vcmask 1044484
    %v352 = vsel %vm351, %v341, %v350
    %vm353 = vcmask 1045509
    %v354 = vsel %vm353, %v342, %v352
    %vm355 = vcmask 1046534
    %v356 = vsel %vm355, %v343, %v354
    %vm357 = vcmask 1047559
    %v358 = vsel %vm357, %v344, %v356
    %vm360 = vcmask 64512
    %v361 = vsel %vm360, %v358, -inf
    %362 = vmax.xlane.f32.xlu0 %v361
    %v363 = vpop.xlane.xlu0 %362
    %v365 = vperm.slane %v363, 0
    %v366 = vperm.slane %v363, 1
    %v367 = vperm.slane %v363, 2
    %v368 = vperm.slane %v363, 3
    %v369 = vperm.slane %v363, 4
    %v370 = vperm.slane %v363, 5
    %v371 = vperm.slane %v363, 6
    %v372 = vperm.slane %v363, 7
    %v381 = vsub.f32 %v305, %v365
    %v382 = vsub.f32 %v308, %v366
    %v383 = vsub.f32 %v311, %v367
    %v384 = vsub.f32 %v314, %v368
    %v385 = vsub.f32 %v317, %v369
    %v386 = vsub.f32 %v320, %v370
    %v387 = vsub.f32 %v323, %v371
    %v388 = vsub.f32 %v326, %v372
    %v389 = vmul.f32 %v381, 1.442695
    %v390 = vpow.pop %v389
    %v391 = vmul.f32 %v382, 1.442695
    %v392 = vpow.pop %v391
    %v393 = vmul.f32 %v383, 1.442695
    %v394 = vpow.pop %v393
    %v395 = vmul.f32 %v384, 1.442695
    %v396 = vpow.pop %v395
    %v397 = vmul.f32 %v385, 1.442695
    %v398 = vpow.pop %v397
    %v399 = vmul.f32 %v386, 1.442695
    %v400 = vpow.pop %v399
    %v401 = vmul.f32 %v387, 1.442695
    %v402 = vpow.pop %v401
    %v403 = vmul.f32 %v388, 1.442695
    %v404 = vpow.pop %v403
    %413 = vset.pattern.permute.xlu0 0
    %414 = vperm.xlu0 %413, %v390
    %v415 = vpop.permute.xlu0 %414
    %416 = vset.pattern.permute.xlu0 0
    %417 = vperm.xlu0 %416, %v392
    %v418 = vpop.permute.xlu0 %417
    %419 = vset.pattern.permute.xlu0 0
    %420 = vperm.xlu0 %419, %v394
    %v421 = vpop.permute.xlu0 %420
    %422 = vset.pattern.permute.xlu0 0
    %423 = vperm.xlu0 %422, %v396
    %v424 = vpop.permute.xlu0 %423
    %425 = vset.pattern.permute.xlu0 0
    %426 = vperm.xlu0 %425, %v398
    %v427 = vpop.permute.xlu0 %426
    %428 = vset.pattern.permute.xlu0 0
    %429 = vperm.xlu0 %428, %v400
    %v430 = vpop.permute.xlu0 %429
    %431 = vset.pattern.permute.xlu0 0
    %432 = vperm.xlu0 %431, %v402
    %v433 = vpop.permute.xlu0 %432
    %434 = vset.pattern.permute.xlu0 0
    %435 = vperm.xlu0 %434, %v404
    %v436 = vpop.permute.xlu0 %435
    %v437 = vperm.slane %v415, %v336
    %v438 = vperm.slane %v418, %v336
    %v439 = vperm.slane %v421, %v336
    %v440 = vperm.slane %v424, %v336
    %v441 = vperm.slane %v427, %v336
    %v442 = vperm.slane %v430, %v336
    %v443 = vperm.slane %v433, %v336
    %v444 = vperm.slane %v436, %v336
    %v445 = vsel %vm345, %v438, %v437
    %v446 = vsel %vm347, %v439, %v445
    %v447 = vsel %vm349, %v440, %v446
    %v448 = vsel %vm351, %v441, %v447
    %v449 = vsel %vm353, %v442, %v448
    %v450 = vsel %vm355, %v443, %v449
    %v451 = vsel %vm357, %v444, %v450
    %v453 = vsel %vm360, %v451, 0.0
    %454 = vadd.xlane.f32.xlu0 %v453
    %v455 = vpop.xlane.xlu0 %454
    %v457 = vperm.slane %v455, 0
    %v458 = vperm.slane %v455, 1
    %v459 = vperm.slane %v455, 2
    %v460 = vperm.slane %v455, 3
    %v461 = vperm.slane %v455, 4
    %v462 = vperm.slane %v455, 5
    %v463 = vperm.slane %v455, 6
    %v464 = vperm.slane %v455, 7
    %v473 = vrcp.pop %v457
    %v474 = vmul.f32 %v457, %v473
    %v475 = vsub.f32 1.0, %v474
    %v476 = vmul.f32 %v473, %v475
    %v477 = vadd.f32 %v473, %v476
    %vm478 = vweird.f32 %v457
    %vm479 = vweird.f32 %v473
    %vm480 = vmor %vm478, %vm479
    %v481 = vsel %vm480, %v473, %v477
    %v482 = vand.u32 2147483647, %v457
    %vm483 = vcmp.eq.f32.partialorder %v482, 8.507059e+37
    %v484 = vand.u32 %v457, 2147483648
    %v485 = vor.u32 1.1754944e-38, %v484
    %v486 = vsel %vm483, %v485, %v481
    %v487 = vmul.f32 %v390, %v486
    %v488 = vrcp.pop %v458
    %v489 = vmul.f32 %v458, %v488
    %v490 = vsub.f32 1.0, %v489
    %v491 = vmul.f32 %v488, %v490
    %v492 = vadd.f32 %v488, %v491
    %vm493 = vweird.f32 %v458
    %vm494 = vweird.f32 %v488
    %vm495 = vmor %vm493, %vm494
    %v496 = vsel %vm495, %v488, %v492
    %v497 = vand.u32 2147483647, %v458
    %vm498 = vcmp.eq.f32.partialorder %v497, 8.507059e+37
    %v499 = vand.u32 %v458, 2147483648
    %v500 = vor.u32 1.1754944e-38, %v499
    %v501 = vsel %vm498, %v500, %v496
    %v502 = vmul.f32 %v392, %v501
    %v503 = vrcp.pop %v459
    %v504 = vmul.f32 %v459, %v503
    %v505 = vsub.f32 1.0, %v504
    %v506 = vmul.f32 %v503, %v505
    %v507 = vadd.f32 %v503, %v506
    %vm508 = vweird.f32 %v459
    %vm509 = vweird.f32 %v503
    %vm510 = vmor %vm508, %vm509
    %v511 = vsel %vm510, %v503, %v507
    %v512 = vand.u32 2147483647, %v459
    %vm513 = vcmp.eq.f32.partialorder %v512, 8.507059e+37
    %v514 = vand.u32 %v459, 2147483648
    %v515 = vor.u32 1.1754944e-38, %v514
    %v516 = vsel %vm513, %v515, %v511
    %v517 = vmul.f32 %v394, %v516
    %v518 = vrcp.pop %v460
    %v519 = vmul.f32 %v460, %v518
    %v520 = vsub.f32 1.0, %v519
    %v521 = vmul.f32 %v518, %v520
    %v522 = vadd.f32 %v518, %v521
    %vm523 = vweird.f32 %v460
    %vm524 = vweird.f32 %v518
    %vm525 = vmor %vm523, %vm524
    %v526 = vsel %vm525, %v518, %v522
    %v527 = vand.u32 2147483647, %v460
    %vm528 = vcmp.eq.f32.partialorder %v527, 8.507059e+37
    %v529 = vand.u32 %v460, 2147483648
    %v530 = vor.u32 1.1754944e-38, %v529
    %v531 = vsel %vm528, %v530, %v526
    %v532 = vmul.f32 %v396, %v531
    %v533 = vrcp.pop %v461
    %v534 = vmul.f32 %v461, %v533
    %v535 = vsub.f32 1.0, %v534
    %v536 = vmul.f32 %v533, %v535
    %v537 = vadd.f32 %v533, %v536
    %vm538 = vweird.f32 %v461
    %vm539 = vweird.f32 %v533
    %vm540 = vmor %vm538, %vm539
    %v541 = vsel %vm540, %v533, %v537
    %v542 = vand.u32 2147483647, %v461
    %vm543 = vcmp.eq.f32.partialorder %v542, 8.507059e+37
    %v544 = vand.u32 %v461, 2147483648
    %v545 = vor.u32 1.1754944e-38, %v544
    %v546 = vsel %vm543, %v545, %v541
    %v547 = vmul.f32 %v398, %v546
    %v548 = vrcp.pop %v462
    %v549 = vmul.f32 %v462, %v548
    %v550 = vsub.f32 1.0, %v549
    %v551 = vmul.f32 %v548, %v550
    %v552 = vadd.f32 %v548, %v551
    %vm553 = vweird.f32 %v462
    %vm554 = vweird.f32 %v548
    %vm555 = vmor %vm553, %vm554
    %v556 = vsel %vm555, %v548, %v552
    %v557 = vand.u32 2147483647, %v462
    %vm558 = vcmp.eq.f32.partialorder %v557, 8.507059e+37
    %v559 = vand.u32 %v462, 2147483648
    %v560 = vor.u32 1.1754944e-38, %v559
    %v561 = vsel %vm558, %v560, %v556
    %v562 = vmul.f32 %v400, %v561
    %v563 = vrcp.pop %v463
    %v564 = vmul.f32 %v463, %v563
    %v565 = vsub.f32 1.0, %v564
    %v566 = vmul.f32 %v563, %v565
    %v567 = vadd.f32 %v563, %v566
    %vm568 = vweird.f32 %v463
    %vm569 = vweird.f32 %v563
    %vm570 = vmor %vm568, %vm569
    %v571 = vsel %vm570, %v563, %v567
    %v572 = vand.u32 2147483647, %v463
    %vm573 = vcmp.eq.f32.partialorder %v572, 8.507059e+37
    %v574 = vand.u32 %v463, 2147483648
    %v575 = vor.u32 1.1754944e-38, %v574
    %v576 = vsel %vm573, %v575, %v571
    %v577 = vmul.f32 %v402, %v576
    %v578 = vrcp.pop %v464
    %v579 = vmul.f32 %v464, %v578
    %v580 = vsub.f32 1.0, %v579
    %v581 = vmul.f32 %v578, %v580
    %v582 = vadd.f32 %v578, %v581
    %vm583 = vweird.f32 %v464
    %vm584 = vweird.f32 %v578
    %vm585 = vmor %vm583, %vm584
    %v586 = vsel %vm585, %v578, %v582
    %v587 = vand.u32 2147483647, %v464
    %vm588 = vcmp.eq.f32.partialorder %v587, 8.507059e+37
    %v589 = vand.u32 %v464, 2147483648
    %v590 = vor.u32 1.1754944e-38, %v589
    %v591 = vsel %vm588, %v590, %v586
    %v592 = vmul.f32 %v404, %v591
    %601 = vset.pattern.permute.xlu0 0
    %602 = vperm.xlu0 %601, %v487
    %v603 = vpop.permute.xlu0 %602
    %604 = vset.pattern.permute.xlu0 0
    %605 = vperm.xlu0 %604, %v502
    %v606 = vpop.permute.xlu0 %605
    %607 = vset.pattern.permute.xlu0 0
    %608 = vperm.xlu0 %607, %v517
    %v609 = vpop.permute.xlu0 %608
    %610 = vset.pattern.permute.xlu0 0
    %611 = vperm.xlu0 %610, %v532
    %v612 = vpop.permute.xlu0 %611
    %613 = vset.pattern.permute.xlu0 0
    %614 = vperm.xlu0 %613, %v547
    %v615 = vpop.permute.xlu0 %614
    %616 = vset.pattern.permute.xlu0 0
    %617 = vperm.xlu0 %616, %v562
    %v618 = vpop.permute.xlu0 %617
    %619 = vset.pattern.permute.xlu0 0
    %620 = vperm.xlu0 %619, %v577
    %v621 = vpop.permute.xlu0 %620
    %622 = vset.pattern.permute.xlu0 0
    %623 = vperm.xlu0 %622, %v592
    %v624 = vpop.permute.xlu0 %623
    %v625 = vperm.slane %v603, %v336
    %v626 = vperm.slane %v606, %v336
    %v627 = vperm.slane %v609, %v336
    %v628 = vperm.slane %v612, %v336
    %v629 = vperm.slane %v615, %v336
    %v630 = vperm.slane %v618, %v336
    %v631 = vperm.slane %v621, %v336
    %v632 = vperm.slane %v624, %v336
    %v633 = vsel %vm345, %v626, %v625
    %v634 = vsel %vm347, %v627, %v633
    %v635 = vsel %vm349, %v628, %v634
    %v636 = vsel %vm351, %v629, %v635
    %v637 = vsel %vm353, %v630, %v636
    %v638 = vsel %vm355, %v631, %v637
    %v639 = vsel %vm357, %v632, %v638
    %641 = vst.msk [vmem:[#allocation17] sm:$0xff] %vm360, %v639
    %v650 = vmul.f32 %v603, %v140
    %v651 = vmul.f32 %v606, %v141
    %v652 = vmul.f32 %v609, %v142
    %v653 = vmul.f32 %v612, %v143
    %v654 = vmul.f32 %v615, %v144
    %v655 = vmul.f32 %v618, %v145
    %v656 = vmul.f32 %v621, %v146
    %v657 = vmul.f32 %v624, %v147
    %v658 = vsel %vm158, %v650, 0.0
    %v659 = vrot.slane %v658, 4
    %v660 = vadd.f32 %v658, %v659
    %v661 = vrot.slane %v660, 2
    %v662 = vadd.f32 %v660, %v661
    %v663 = vrot.slane %v662, 1
    %v664 = vadd.f32 %v662, %v663
    %v665 = vsel %vm158, %v651, 0.0
    %v666 = vrot.slane %v665, 4
    %v667 = vadd.f32 %v665, %v666
    %v668 = vrot.slane %v667, 2
    %v669 = vadd.f32 %v667, %v668
    %v670 = vrot.slane %v669, 1
    %v671 = vadd.f32 %v669, %v670
    %v672 = vsel %vm158, %v652, 0.0
    %v673 = vrot.slane %v672, 4
    %v674 = vadd.f32 %v672, %v673
    %v675 = vrot.slane %v674, 2
    %v676 = vadd.f32 %v674, %v675
    %v677 = vrot.slane %v676, 1
    %v678 = vadd.f32 %v676, %v677
    %v679 = vsel %vm158, %v653, 0.0
    %v680 = vrot.slane %v679, 4
    %v681 = vadd.f32 %v679, %v680
    %v682 = vrot.slane %v681, 2
    %v683 = vadd.f32 %v681, %v682
    %v684 = vrot.slane %v683, 1
    %v685 = vadd.f32 %v683, %v684
    %v686 = vsel %vm158, %v654, 0.0
    %v687 = vrot.slane %v686, 4
    %v688 = vadd.f32 %v686, %v687
    %v689 = vrot.slane %v688, 2
    %v690 = vadd.f32 %v688, %v689
    %v691 = vrot.slane %v690, 1
    %v692 = vadd.f32 %v690, %v691
    %v693 = vsel %vm158, %v655, 0.0
    %v694 = vrot.slane %v693, 4
    %v695 = vadd.f32 %v693, %v694
    %v696 = vrot.slane %v695, 2
    %v697 = vadd.f32 %v695, %v696
    %v698 = vrot.slane %v697, 1
    %v699 = vadd.f32 %v697, %v698
    %v700 = vsel %vm158, %v656, 0.0
    %v701 = vrot.slane %v700, 4
    %v702 = vadd.f32 %v700, %v701
    %v703 = vrot.slane %v702, 2
    %v704 = vadd.f32 %v702, %v703
    %v705 = vrot.slane %v704, 1
    %v706 = vadd.f32 %v704, %v705
    %v707 = vsel %vm158, %v657, 0.0
    %v708 = vrot.slane %v707, 4
    %v709 = vadd.f32 %v707, %v708
    %v710 = vrot.slane %v709, 2
    %v711 = vadd.f32 %v709, %v710
    %v712 = vrot.slane %v711, 1
    %v713 = vadd.f32 %v711, %v712
    %v722 = vsel %vm345, %v671, %v664
    %v723 = vsel %vm347, %v678, %v722
    %v724 = vsel %vm349, %v685, %v723
    %v725 = vsel %vm351, %v692, %v724
    %v726 = vsel %vm353, %v699, %v725
    %v727 = vsel %vm355, %v706, %v726
    %v728 = vsel %vm357, %v713, %v727
    %730 = vrot.lane.b32.xlu0 %v148, 32
    %v731 = vpop.permute.xlu0 %730
    %v733 = vsel %vm158, %v728, %v731
    %v734 = vld [vmem:[#allocation13] sm:$0xff]
    %v735 = vld [vmem:[#allocation13 + $0x8] sm:$0xff]
    %v736 = vld [vmem:[#allocation13 + $0x10] sm:$0xff]
    %v737 = vld [vmem:[#allocation13 + $0x18] sm:$0xff]
    %v738 = vld [vmem:[#allocation13 + $0x20] sm:$0xff]
    %v739 = vld [vmem:[#allocation13 + $0x28] sm:$0xff]
    %v740 = vld [vmem:[#allocation13 + $0x30] sm:$0xff]
    %v741 = vld [vmem:[#allocation13 + $0x38] sm:$0xff]
    %v742 = vld [vmem:[#allocation8] sm:$0xff]
    %vm743 = vcmask 523264
    %v745 = vsel %vm743, %v733, 0
    %747 = vmatpush.msra.mxu0 0.0
    %748 = vmatpush.msra.mxu0 0.0
    %749 = vmatpush.msra.mxu0 0.0
    %750 = vmatpush.msra.mxu0 0.0
    %751 = vmatpush.msra.mxu0 0.0
    %752 = vmatpush.msra.mxu0 0.0
    %753 = vmatpush.msra.mxu0 0.0
    %754 = vmatpush.msra.mxu0 0.0
    %755 = vmatpush.msra.mxu0 %v741
    %756 = vmatpush.msra.mxu0 %v740
    %757 = vmatpush.msra.mxu0 %v739
    %758 = vmatpush.msra.mxu0 %v738
    %759 = vmatpush.msra.mxu0 %v737
    %760 = vmatpush.msra.mxu0 %v736
    %761 = vmatpush.msra.mxu0 %v735
    %762 = vmatpush.msra.mxu0 %v734
    %763 = vmatmul.f32.gmra.mxu0 %v745
    %v764 = vpop.f32.mrf.mxu0
    %v765 = vadd.f32 %v742, %v764
    %766 = vdwg.mxu0
    %v767 = vxor.u32 %v765, 2147483648
    %v768 = vmul.f32 %v767, 1.442695
    %v769 = vpow.pop %v768
    %v770 = vadd.f32 %v769, 1.0
    %v771 = vrcp.pop %v770
    %v772 = vmul.f32 %v770, %v771
    %v773 = vsub.f32 1.0, %v772
    %v774 = vmul.f32 %v771, %v773
    %v775 = vadd.f32 %v771, %v774
    %vm776 = vweird.f32 %v770
    %vm777 = vweird.f32 %v771
    %vm778 = vmor %vm776, %vm777
    %v779 = vsel %vm778, %v771, %v775
    %v780 = vand.u32 2147483647, %v770
    %vm781 = vcmp.eq.f32.partialorder %v780, 8.507059e+37
    %v782 = vand.u32 %v770, 2147483648
    %v783 = vor.u32 1.1754944e-38, %v782
    %v784 = vsel %vm781, %v783, %v779
    %v785 = vmul.f32 1.0, %v784
    %v786 = vtanh.pop %v765
    %788 = vrot.lane.b32.xlu0 %v149, 32
    %v789 = vpop.permute.xlu0 %788
    %v791 = vmul.f32 %v785, %v789
    %793 = vrot.lane.b32.xlu0 %v786, 64
    %v794 = vpop.permute.xlu0 %793
    %v796 = vmul.f32 %v785, %v794
    %798 = vrot.lane.b32.xlu0 %v796, 32
    %v799 = vpop.permute.xlu0 %798
    %v801 = vadd.f32 %v791, %v799
    %v802 = vtanh.pop %v801
    %804 = vrot.lane.b32.xlu0 %v802, 64
    %v805 = vpop.permute.xlu0 %804
    %v807 = vmul.f32 %v785, %v805
    %809 = vrot.lane.b32.xlu0 %v807, 32
    %v810 = vpop.permute.xlu0 %809
    %812 = vst.msk [vmem:[#allocation14] sm:$0xff] %vm158, %v810
    %814 = vrot.lane.b32.xlu0 %v801, 96
    %v815 = vpop.permute.xlu0 %814
    %817 = vst.msk [vmem:[#allocation15] sm:$0xff] %vm158, %v815
    // Predicated region
    $region66: #{tpu_custom_call.1} parent=1 // pred_check
      _
    $region67: #{tpu_custom_call.1} parent=1 // pred_check_branch
      %819 = sbr.rel (0) target = $region69
    $region68: #{tpu_custom_call.1} parent=1 // pred_region
      %821 = vsyncadd [#allocation4], 0
      %s823 = sshll.u32 [#allocation14], 4
      %s824 = int_to_ptr.vmem [resolvable:$true] %s823
      %s825 = sshll.u32 %s9, 4
      %s826 = int_to_ptr.hbm [resolvable:$true] %s825
      %828 = dma.vmem_to_hbm [thread:$0]  %s824, 128, %s826, [#allocation4]
    $region69: #{tpu_custom_call.1} parent=1 // pred_fallthru
      _
    // Predicated region
    $region70: #{tpu_custom_call.1} parent=1 // pred_check
      _
    $region71: #{tpu_custom_call.1} parent=1 // pred_check_branch
      %830 = sbr.rel (0) target = $region73
    $region72: #{tpu_custom_call.1} parent=1 // pred_region
      %832 = vsyncadd [#allocation16], 0
      %s834 = sshll.u32 [#allocation15], 4
      %s835 = int_to_ptr.vmem [resolvable:$true] %s834
      %s836 = sshll.u32 %s10, 4
      %s837 = int_to_ptr.hbm [resolvable:$true] %s836
      %839 = dma.vmem_to_hbm [thread:$0]  %s835, 128, %s837, [#allocation16]
    $region73: #{tpu_custom_call.1} parent=1 // pred_fallthru
      _
    // Predicated region
    $region74: #{tpu_custom_call.1} parent=1 // pred_check
      _
    $region75: #{tpu_custom_call.1} parent=1 // pred_check_branch
      %841 = sbr.rel (0) target = $region77
    $region76: #{tpu_custom_call.1} parent=1 // pred_region
      %843 = vsyncadd [#allocation16], 0
      %s845 = sshll.u32 [#allocation17], 4
      %s846 = int_to_ptr.vmem [resolvable:$true] %s845
      %s847 = sshll.u32 %s11, 4
      %s848 = int_to_ptr.hbm [resolvable:$true] %s847
      %850 = dma.vmem_to_hbm [thread:$0]  %s846, 128, %s848, [#allocation16]
    $region77: #{tpu_custom_call.1} parent=1 // pred_fallthru
      _
    // Predicated region
    $region78: #{tpu_custom_call.1} parent=1 // pred_check
      _
    $region79: #{tpu_custom_call.1} parent=1 // pred_check_branch
      %852 = sbr.rel (0) target = $region81
    $region80: #{tpu_custom_call.1} parent=1 // pred_region
      %854 = dma.done [#allocation4], 128
    $region81: #{tpu_custom_call.1} parent=1 // pred_fallthru
      _
    // Predicated region
    $region82: #{tpu_custom_call.1} parent=1 // pred_check
      _
    $region83: #{tpu_custom_call.1} parent=1 // pred_check_branch
      %856 = sbr.rel (0) target = $region85
    $region84: #{tpu_custom_call.1} parent=1 // pred_region
      %858 = dma.done [#allocation16], 128
    $region85: #{tpu_custom_call.1} parent=1 // pred_fallthru
      _
    // Predicated region
    $region86: #{tpu_custom_call.1} parent=1 // pred_check
      _
    $region87: #{tpu_custom_call.1} parent=1 // pred_check_branch
      %860 = sbr.rel (0) target = $region89
    $region88: #{tpu_custom_call.1} parent=1 // pred_region
      %862 = dma.done [#allocation16], 128
    $region89: #{tpu_custom_call.1} parent=1 // pred_fallthru
      _
    %863 = vsyncpa [#allocation3], 1
    %864 = vsyncpa [#allocation6], 1
    %865 = vsyncpa [#allocation9], 1
    %866 = vsyncpa [#allocation12], 1
    %867 = vsyncpa [#allocation4], 1
    %868 = vsyncpa [#allocation16], 1

</llo_original>
